<compile_context>
chip_gen: v7x
topology: tpu7x:2x2x1
jax: 0.10.0
libtpu: 0.0.40
codegen_flags: <defaults>
</compile_context>

<pallas_src>
import jax
import jax.numpy as jnp
from jax.experimental import pallas as pl
from jax.experimental.pallas import tpu as pltpu

_LANES = 128
_GRANULE = 16  # bf16 sublane-pair granule (also valid for f32 tiles)


def _round_up(x, m):
    return ((x + m - 1) // m) * m


def _cdiv(a, b):
    return (a + b - 1) // b


def _vmem_limit_bytes():
    """Per-generation scoped VMEM limit (~half of physical VMEM).

    v7x: 64 MiB physical -> 32 MiB limit; v5e/v6e: 128 MiB -> 64 MiB.
    """
    phys = 64 * 1024 * 1024
    try:
        info = pltpu.get_tpu_info()
        phys = int(getattr(info, "vmem_capacity_bytes", phys))
    except Exception:
        pass
    return int(min(96 * 1024 * 1024, max(32 * 1024 * 1024, phys // 2)))


def _linear_kernel_direct(x_ref, w_ref, b_ref, o_ref):
    # x_ref: (TN, H) f32, w_ref: (H, c_pad) bf16, b_ref: (1, c_pad) f32,
    # o_ref: (TN, c_pad) f32.  In-kernel bf16 cast of the activations (free
    # under mem-bound), MXU matmul with f32 accumulation, f32 bias add,
    # lane-dense (128-wide) output store.
    x = x_ref[...].astype(w_ref.dtype)
    acc = jnp.dot(x, w_ref[...], preferred_element_type=jnp.float32)
    o_ref[...] = (acc + b_ref[...]).astype(o_ref.dtype)


def _linear_kernel_ktiled(x_ref, w_ref, b_ref, o_ref, acc_ref):
    # Same as above but with the hidden dim tiled over grid axis 1
    # ("arbitrary"): f32 accumulator scratch, bias add + store on last step.
    k = pl.program_id(1)

    @pl.when(k == 0)
    def _():
        acc_ref[...] = jnp.zeros_like(acc_ref)

    x = x_ref[...].astype(w_ref.dtype)
    acc_ref[...] += jnp.dot(x, w_ref[...], preferred_element_type=jnp.float32)

    @pl.when(k == pl.num_programs(1) - 1)
    def _():
        o_ref[...] = (acc_ref[...] + b_ref[...]).astype(o_ref.dtype)


def node_classifier_forward(embeddings, weight, bias, *, tile_n=None,
                            compute_dtype=jnp.bfloat16):
    """Pallas equivalent of nn.Linear(hidden_size, num_classes).forward.

    embeddings: [N, H] float32
    weight:     [C, H] float32  (PyTorch nn.Linear layout)
    bias:       [C]    float32
    returns:    [N, C] in embeddings.dtype
    """
    N, H = embeddings.shape
    C, H2 = weight.shape
    assert H == H2 and bias.shape == (C,)

    out_dtype = embeddings.dtype
    c_pad = _round_up(C, _LANES)

    x_bytes = jnp.dtype(embeddings.dtype).itemsize
    w_bytes = jnp.dtype(compute_dtype).itemsize
    o_bytes = jnp.dtype(out_dtype).itemsize

    # Pre-transpose + lane-pad the weight once (tiny [C, H] array, trace time).
    w_t = jnp.zeros((H, c_pad), dtype=compute_dtype)
    w_t = w_t.at[:, :C].set(weight.T.astype(compute_dtype))
    b_pad = jnp.zeros((1, c_pad), dtype=jnp.float32)
    b_pad = b_pad.at[0, :C].set(bias.astype(jnp.float32))

    vmem_limit = _vmem_limit_bytes()
    budget = (vmem_limit * 3) // 4  # headroom for compiler-internal scratch

    # ---- K (hidden) tiling: only if the double-buffered weight block would
    # eat too much of the budget and H is lane-tileable (mostly a v7x case).
    tile_k = H
    w_block_budget = budget // 3
    if 2 * H * c_pad * w_bytes > w_block_budget and H % _LANES == 0:
        for kb in range(2, H // _LANES + 1):
            if H % kb:
                continue
            tk = H // kb
            if tk % _LANES:
                continue
            if 2 * tk * c_pad * w_bytes <= w_block_budget:
                tile_k = tk
                break
    k_blocks = H // tile_k if H % tile_k == 0 else 1

    # ---- N (row) tiling: byte-capped x tile, bounded by what fits in VMEM.
    # Pallas double-buffers EVERY BlockSpec input, including the "resident"
    # weight/bias (constant index_map), so account for the x2.
    if tile_n is None:
        resident = 2 * tile_k * c_pad * w_bytes + 2 * c_pad * 4
        per_row = 2 * tile_k * x_bytes + 2 * c_pad * o_bytes
        if k_blocks > 1:
            per_row += c_pad * 4  # f32 accumulator scratch (single-buffered)
        fit_rows = max(_GRANULE, (budget - resident) // per_row)
        target_rows = max(_GRANULE, (8 * 1024 * 1024) // (tile_k * x_bytes))
        tile_n = min(fit_rows, target_rows)
    tile_n = min(tile_n, _round_up(N, _GRANULE))
    tile_n = max(_GRANULE, (tile_n // _GRANULE) * _GRANULE)

    # Keep >= 2 grid steps along the parallel axis when N allows it, so both
    # v7x TensorCores get work (harmless no-op on single-TC v5e/v6e).
    if _cdiv(N, tile_n) < 2 and N > _GRANULE:
        tile_n = max(_GRANULE, _round_up(_cdiv(N, 2), _GRANULE))

    n_blocks = _cdiv(N, tile_n)

    cost = pl.CostEstimate(
        flops=int(2 * N * H * c_pad),
        transcendentals=0,
        bytes_accessed=int(N * H * x_bytes + H * c_pad * w_bytes
                           + c_pad * 4 + N * c_pad * o_bytes))

    if k_blocks == 1:
        kernel = _linear_kernel_direct
        grid_spec = pltpu.PrefetchScalarGridSpec(
            num_scalar_prefetch=0,
            grid=(n_blocks,),
            in_specs=[
                pl.BlockSpec((tile_n, H), lambda i: (i, 0)),   # embeddings tile
                pl.BlockSpec((H, c_pad), lambda i: (0, 0)),    # resident weight
                pl.BlockSpec((1, c_pad), lambda i: (0, 0)),    # resident bias
            ],
            out_specs=pl.BlockSpec((tile_n, c_pad), lambda i: (i, 0)),
        )
        dims = ("parallel",)
    else:
        kernel = _linear_kernel_ktiled
        grid_spec = pltpu.PrefetchScalarGridSpec(
            num_scalar_prefetch=0,
            grid=(n_blocks, k_blocks),
            in_specs=[
                pl.BlockSpec((tile_n, tile_k), lambda i, k: (i, k)),
                pl.BlockSpec((tile_k, c_pad), lambda i, k: (k, 0)),
                pl.BlockSpec((1, c_pad), lambda i, k: (0, 0)),
            ],
            out_specs=pl.BlockSpec((tile_n, c_pad), lambda i, k: (i, 0)),
            scratch_shapes=[pltpu.VMEM((tile_n, c_pad), jnp.float32)],
        )
        dims = ("parallel", "arbitrary")

    out_pad = pl.pallas_call(
        kernel,
        out_shape=jax.ShapeDtypeStruct((N, c_pad), out_dtype),
        grid_spec=grid_spec,
        compiler_params=pltpu.CompilerParams(
            dimension_semantics=dims,
            vmem_limit_bytes=vmem_limit,
        ),
        cost_estimate=cost,
    )(embeddings, w_t, b_pad)

    return out_pad[:, :C]


if __name__ == "__main__":
    hidden_size = 32
    num_classes = 8
    num_nodes = 16

    key = jax.random.PRNGKey(0)
    k_x, k_w, k_b, k_x2 = jax.random.split(key, 4)

    embeddings = jax.random.normal(k_x, (num_nodes, hidden_size), dtype=jnp.float32)
    weight = jax.random.normal(k_w, (num_classes, hidden_size), dtype=jnp.float32) * 0.1
    bias = jax.random.normal(k_b, (num_classes,), dtype=jnp.float32) * 0.1

    out = node_classifier_forward(embeddings, weight, bias)
    out = jax.block_until_ready(out)

    # Reference with the same bf16 quantization of x/w + f32 accumulation.
    def bf16_ref(x):
        x_bf = x.astype(jnp.bfloat16).astype(jnp.float32)
        w_bf = weight.astype(jnp.bfloat16).astype(jnp.float32)
        return x_bf @ w_bf.T + bias

    assert out.shape == (num_nodes, num_classes)
    assert jnp.allclose(out, bf16_ref(embeddings), atol=1e-3, rtol=1e-3)
    # Loose check against the full-precision f32 reference as well.
    assert jnp.allclose(out, embeddings @ weight.T + bias, atol=5e-2, rtol=5e-2)

    # Ragged-N path (partial last block, no explicit padding pass).
    n_ragged = 13
    out_r = node_classifier_forward(embeddings[:n_ragged], weight, bias)
    out_r = jax.block_until_ready(out_r)
    assert out_r.shape == (n_ragged, num_classes)
    assert jnp.allclose(out_r, bf16_ref(embeddings[:n_ragged]), atol=1e-3, rtol=1e-3)

    # Multi-step grid (>=2 parallel blocks + partial last block).
    n_big = 50
    emb_big = jax.random.normal(k_x2, (n_big, hidden_size), dtype=jnp.float32)
    out_b = node_classifier_forward(emb_big, weight, bias)
    out_b = jax.block_until_ready(out_b)
    assert out_b.shape == (n_big, num_classes)
    assert jnp.allclose(out_b, bf16_ref(emb_big), atol=1e-3, rtol=1e-3)

    print("KERNEL_OK")
</pallas_src>

<mosaic_0001>
module attributes {stable_mosaic.version = 11 : i64} {
  func.func @_linear_kernel_direct(%arg0: i32, %arg1: memref<16x32xf32, #tpu.memory_space<vmem>>, %arg2: memref<32x128xbf16, #tpu.memory_space<vmem>>, %arg3: memref<1x128xf32, #tpu.memory_space<vmem>>, %arg4: memref<16x128xf32, #tpu.memory_space<vmem>>) attributes {dimension_semantics = [#tpu.dimension_semantics<parallel>], iteration_bounds = array<i64: 1>, scalar_prefetch = 0 : i64, scratch_operands = 0 : i64, tpu.core_type = #tpu.core_type<tc>, window_params = [{transform_indices = @transform_0, window_bounds = array<i64: 16, 32>}, {pipeline_mode = #tpu.pipeline_mode<synchronous>, transform_indices = @transform_1, window_bounds = array<i64: 32, 128>}, {pipeline_mode = #tpu.pipeline_mode<synchronous>, transform_indices = @transform_2, window_bounds = array<i64: 1, 128>}, {transform_indices = @transform_3, window_bounds = array<i64: 16, 128>}]} {
    %c0 = arith.constant 0 : index
    %c0_0 = arith.constant 0 : index
    %0 = vector.load %arg1[%c0, %c0_0] : memref<16x32xf32, #tpu.memory_space<vmem>>, vector<16x32xf32>
    %1 = arith.truncf %0 : vector<16x32xf32> to vector<16x32xbf16>
    %c0_1 = arith.constant 0 : index
    %c0_2 = arith.constant 0 : index
    %2 = vector.load %arg2[%c0_1, %c0_2] : memref<32x128xbf16, #tpu.memory_space<vmem>>, vector<32x128xbf16>
    %cst = arith.constant dense<0.000000e+00> : vector<16x128xf32>
    %3 = tpu.matmul %1, %2, %cst {dimension_numbers = #tpu.dot_dimension_numbers<[1], [0], [0], [1], [0, 0, 1, 1], [], []>} : vector<16x32xbf16>, vector<32x128xbf16>, vector<16x128xf32> -> vector<16x128xf32>
    %c0_3 = arith.constant 0 : index
    %c0_4 = arith.constant 0 : index
    %4 = vector.load %arg3[%c0_3, %c0_4] : memref<1x128xf32, #tpu.memory_space<vmem>>, vector<1x128xf32>
    %5 = vector.broadcast %4 : vector<1x128xf32> to vector<16x128xf32>
    %6 = arith.addf %3, %5 : vector<16x128xf32>
    %c0_5 = arith.constant 0 : index
    %c0_6 = arith.constant 0 : index
    %7 = vector.load %arg4[%c0_5, %c0_6] : memref<16x128xf32, #tpu.memory_space<vmem>>, vector<16x128xf32>
    tpu.vector_store %arg4[%c0_5, %c0_6], %6 {strides = array<i32>} : memref<16x128xf32, #tpu.memory_space<vmem>>, vector<16x128xf32>,
    return
  }
  func.func @transform_0(%arg0: i32) -> (i32, i32) {
    %c0_i32 = arith.constant 0 : i32
    %c0_i32_0 = arith.constant 0 : i32
    return %arg0, %c0_i32 : i32, i32
  }
  func.func @transform_1(%arg0: i32) -> (i32, i32) {
    %c0_i32 = arith.constant 0 : i32
    %c0_i32_0 = arith.constant 0 : i32
    %c0_i32_1 = arith.constant 0 : i32
    return %c0_i32, %c0_i32_0 : i32, i32
  }
  func.func @transform_2(%arg0: i32) -> (i32, i32) {
    %c0_i32 = arith.constant 0 : i32
    %c0_i32_0 = arith.constant 0 : i32
    %c0_i32_1 = arith.constant 0 : i32
    return %c0_i32, %c0_i32_0 : i32, i32
  }
  func.func @transform_3(%arg0: i32) -> (i32, i32) {
    %c0_i32 = arith.constant 0 : i32
    %c0_i32_0 = arith.constant 0 : i32
    return %arg0, %c0_i32 : i32, i32
  }
}

</mosaic_0001>

<llo_original>
// kernel: tpu_custom_call.1
$region0: #{tpu_custom_call.1}
  #allocation0 [shape = 'u32[]', space=smem, size = 0x4, offset = 0x4, fixed_abs, tag = 'smem constant byte address 0x4 - core index']
  #allocation1 [shape = 'u32[144,128]{1,0:T(1,128)}', space=vmem, size = 0x12000, scoped, tag = 'internal scratch']
  %s0 = inlined_call_operand.hbm [shape: f32[16,32], index: 0, kind: input, shape index: {}]
  %s1 = inlined_call_operand.hbm [shape: bf16[32,128], index: 1, kind: input, shape index: {}]
  %s2 = inlined_call_operand.vmem [shape: f32[1,128], index: 2, kind: input, shape index: {}]
  %s3 = inlined_call_operand.hbm [shape: f32[16,128], index: 3, kind: output, shape index: {}]
  %s4 = sld [smem:[#allocation0]]
  $region30: #{tpu_custom_call.1} parent=0
    _
  %s6 = ssub.s32 1, %s4
  %s7 = scalar_select 0, %s6, %s4
  $region1: #{tpu_custom_call.1} parent=0
    #allocation2 [shape = 'u8[8192]{0}', space=vmem, size = 0x2000, scoped, tag = 'input window, operand 0, single buffered']
    #allocation3 [shape = 's32[1]{0}', space=sflag, size = 0x4, scoped, tag = 'scoped memory for tpu_custom_call.1']
    #allocation4 [shape = 's32[1]{0}', space=sflag, size = 0x4, scoped, tag = 'scoped memory for tpu_custom_call.1']
    #allocation5 [shape = 'u8[8192]{0}', space=vmem, size = 0x2000, scoped, tag = 'input window, operand 1, single buffered']
    #allocation6 [shape = 's32[1]{0}', space=sflag, size = 0x4, scoped, tag = 'scoped memory for tpu_custom_call.1']
    #allocation7 [shape = 'u8[8192]{0}', space=vmem, size = 0x2000, scoped, tag = 'output window, operand 0, single buffered']
    %8 = vsyncpa [#allocation3], 0
    %9 = vsyncpa [#allocation6], 0
    %10 = vsyncpa [#allocation4], 0
    // Predicated region
    $region2: #{tpu_custom_call.1} parent=1 // pred_check
      _
    $region3: #{tpu_custom_call.1} parent=1 // pred_check_branch
      %12 = sbr.rel (0) target = $region5
    $region4: #{tpu_custom_call.1} parent=1 // pred_region
      %s14 = ssub.s32 256, 256
      %15 = vsyncadd [#allocation3], %s14
      %s16 = sshll.u32 [#allocation2], 4
      %s17 = int_to_ptr.vmem [resolvable:$true] %s16
      %22 = dma.hbm_to_vmem [thread:$0]  %s0, 256, %s17, [#allocation3], 128, 128, 8
    $region5: #{tpu_custom_call.1} parent=1 // pred_fallthru
      _
    // Predicated region
    $region6: #{tpu_custom_call.1} parent=1 // pred_check
      _
    $region7: #{tpu_custom_call.1} parent=1 // pred_check_branch
      %24 = sbr.rel (0) target = $region9
    $region8: #{tpu_custom_call.1} parent=1 // pred_region
      %s26 = ssub.s32 256, 256
      %27 = vsyncadd [#allocation6], %s26
      %s28 = sshll.u32 [#allocation5], 4
      %s29 = int_to_ptr.vmem [resolvable:$true] %s28
      %34 = dma.hbm_to_vmem [thread:$0]  %s1, 256, %s29, [#allocation6], 64, 64, 4
    $region9: #{tpu_custom_call.1} parent=1 // pred_fallthru
      _
    // Predicated region
    $region10: #{tpu_custom_call.1} parent=1 // pred_check
      _
    $region11: #{tpu_custom_call.1} parent=1 // pred_check_branch
      %36 = sbr.rel (0) target = $region13
    $region12: #{tpu_custom_call.1} parent=1 // pred_region
      _
    $region13: #{tpu_custom_call.1} parent=1 // pred_fallthru
      _
    // Predicated region
    $region14: #{tpu_custom_call.1} parent=1 // pred_check
      _
    $region15: #{tpu_custom_call.1} parent=1 // pred_check_branch
      %38 = sbr.rel (0) target = $region17
    $region16: #{tpu_custom_call.1} parent=1 // pred_region
      %39 = dma.done [#allocation3], 256
    $region17: #{tpu_custom_call.1} parent=1 // pred_fallthru
      _
    // Predicated region
    $region18: #{tpu_custom_call.1} parent=1 // pred_check
      _
    $region19: #{tpu_custom_call.1} parent=1 // pred_check_branch
      %41 = sbr.rel (0) target = $region21
    $region20: #{tpu_custom_call.1} parent=1 // pred_region
      %42 = dma.done [#allocation6], 256
    $region21: #{tpu_custom_call.1} parent=1 // pred_fallthru
      _
    %v44 = vld [vmem:[#allocation2] sm:$0xff]
    %v45 = vld [vmem:[#allocation2 + $0x8] sm:$0xff]
    %v46 = vpack.c.bf16 %v45, %v44
    %v47 = vld [vmem:[#allocation5] sm:$0xf]
    %v48 = vld [vmem:[#allocation5 + $0x4] sm:$0xf]
    %v49 = vld [vmem:[#allocation5 + $0x8] sm:$0xf]
    %v50 = vld [vmem:[#allocation5 + $0xc] sm:$0xf]
    %v51 = vld [vmem:[%s2] sm:$0x1]
    %v53 = vlaneseq
    %v54 = vshrl.u32 %v53, 7
    %v55 = vsub.s32 0, %v54
    %v56 = vrot.slane %v51, %v55
    %v62 = vunpack.c.l.b16 %v47
    %v63 = vunpack.c.l.b16 %v48
    %v64 = vunpack.c.l.b16 %v49
    %v65 = vunpack.c.l.b16 %v50
    %v66 = vpack.c.b16 %v63, %v62
    %v67 = vpack.c.b16 %v65, %v64
    %vm70 = vcmask 261120
    %v72 = vsel %vm70, %v46, 0
    %74 = vmatprep.subr.bf16.mxu0 0
    %75 = vmatpush1.bf16.msra.mxu0 %v66
    %76 = vmatprep.subr.bf16.mxu0 0
    %77 = vmatpush1.bf16.msra.mxu0 %v67
    %78 = vmatprep.subr.bf16.mxu0 0
    %79 = vmatpush1.bf16.msra.mxu0 0
    %80 = vmatprep.subr.bf16.mxu0 0
    %81 = vmatpush1.bf16.msra.mxu0 0
    %82 = vmatprep.subr.bf16.mxu0 0
    %83 = vmatpush1.bf16.msra.mxu0 0
    %84 = vmatprep.subr.bf16.mxu0 0
    %85 = vmatpush1.bf16.msra.mxu0 0
    %86 = vmatprep.subr.bf16.mxu0 0
    %87 = vmatpush1.bf16.msra.mxu0 0
    %88 = vmatprep.subr.bf16.mxu0 0
    %89 = vmatpush1.bf16.msra.mxu0 0
    %90 = vmatprep.subr.bf16.mxu0 0
    %91 = vmatpush1.bf16.msra.mxu0 0
    %92 = vmatprep.subr.bf16.mxu0 0
    %93 = vmatpush1.bf16.msra.mxu0 0
    %94 = vmatprep.subr.bf16.mxu0 0
    %95 = vmatpush1.bf16.msra.mxu0 0
    %96 = vmatprep.subr.bf16.mxu0 0
    %97 = vmatpush1.bf16.msra.mxu0 0
    %98 = vmatprep.subr.bf16.mxu0 0
    %99 = vmatpush1.bf16.msra.mxu0 0
    %100 = vmatprep.subr.bf16.mxu0 0
    %101 = vmatpush1.bf16.msra.mxu0 0
    %102 = vmatprep.subr.bf16.mxu0 0
    %103 = vmatpush1.bf16.msra.mxu0 0
    %104 = vmatprep.subr.bf16.mxu0 0
    %105 = vmatpush1.bf16.msra.mxu0 0
    %106 = vmatprep.mubr.bf16.mxu0 0
    %107 = vmatmul.mubr.bf16.gmra.mrb[0].mxu0 %v72
    %v108 = vpop.f32.mrb[0].mxu0
    %v109 = vadd.f32 %v56, %v108
    %v110 = vpop.f32.mrb[0].mxu0
    %v111 = vpop.f32.mrb[0].mxu0
    %v112 = vadd.f32 %v56, %v111
    %v113 = vpop.f32.mrb[0].mxu0
    %114 = vdwg.mxu0
    %115 = vst [vmem:[#allocation7] sm:$0xff] %v109
    %116 = vst [vmem:[#allocation7 + $0x8] sm:$0xff] %v112
    // Predicated region
    $region22: #{tpu_custom_call.1} parent=1 // pred_check
      _
    $region23: #{tpu_custom_call.1} parent=1 // pred_check_branch
      %118 = sbr.rel (0) target = $region25
    $region24: #{tpu_custom_call.1} parent=1 // pred_region
      %s120 = ssub.s32 256, 256
      %121 = vsyncadd [#allocation4], %s120
      %s122 = sshll.u32 [#allocation7], 4
      %s123 = int_to_ptr.vmem [resolvable:$true] %s122
      %128 = dma.vmem_to_hbm [thread:$0]  %s123, 256, %s3, [#allocation4], 128, 128, 8
    $region25: #{tpu_custom_call.1} parent=1 // pred_fallthru
      _
    // Predicated region
    $region26: #{tpu_custom_call.1} parent=1 // pred_check
      _
    $region27: #{tpu_custom_call.1} parent=1 // pred_check_branch
      %130 = sbr.rel (0) target = $region29
    $region28: #{tpu_custom_call.1} parent=1 // pred_region
      %131 = dma.done [#allocation4], 256
    $region29: #{tpu_custom_call.1} parent=1 // pred_fallthru
      _
    %132 = vsyncpa [#allocation3], 1
    %133 = vsyncpa [#allocation6], 1
    %134 = vsyncpa [#allocation4], 1

</llo_original>
